<compile_context>
chip_gen: v7x
topology: tpu7x:2x2x1
jax: 0.10.0
libtpu: 0.0.40
codegen_flags: <defaults>
</compile_context>

<pallas_src>
import math

import jax
import jax.numpy as jnp
from jax.experimental import pallas as pl
from jax.experimental.pallas import tpu as pltpu

EPS = 1e-5  # PyTorch F.layer_norm default

_MAX_INPUT_BLOCK_BYTES = 4 * 1024 * 1024   # keep input blocks ~1-4 MiB
_MIN_GRID_STEPS = 8                        # >=4 pipelined steps per TC on v7x megacore


# ---------------------------------------------------------------------------
# Kernels
# ---------------------------------------------------------------------------

def _layernorm_affine_kernel(x_ref, wb_ref, o_ref):
    # x_ref: (tile_rows, H); wb_ref: (2, H) with row 0 = weight, row 1 = bias.
    w = wb_ref[0:1, :].astype(jnp.float32)
    b = wb_ref[1:2, :].astype(jnp.float32)

    x = x_ref[...].astype(jnp.float32)
    inv_h = 1.0 / x.shape[-1]
    s1 = jnp.sum(x, axis=-1, keepdims=True)
    s2 = jnp.sum(x * x, axis=-1, keepdims=True)
    mean = s1 * inv_h
    # One-pass biased variance; clamp guards against tiny negative values from
    # floating-point cancellation before rsqrt.
    var = jnp.maximum(s2 * inv_h - mean * mean, 0.0)
    inv = jax.lax.rsqrt(var + EPS)
    o_ref[...] = ((x - mean) * inv * w + b).astype(o_ref.dtype)


def _layernorm_plain_kernel(x_ref, o_ref):
    # No-affine path: skips the weight/bias DMA and the two extra VALU passes.
    x = x_ref[...].astype(jnp.float32)
    inv_h = 1.0 / x.shape[-1]
    s1 = jnp.sum(x, axis=-1, keepdims=True)
    s2 = jnp.sum(x * x, axis=-1, keepdims=True)
    mean = s1 * inv_h
    var = jnp.maximum(s2 * inv_h - mean * mean, 0.0)
    inv = jax.lax.rsqrt(var + EPS)
    o_ref[...] = ((x - mean) * inv).astype(o_ref.dtype)


# ---------------------------------------------------------------------------
# Tiling helpers
# ---------------------------------------------------------------------------

def _sublane_multiple(dtype) -> int:
    itemsize = jnp.dtype(dtype).itemsize
    if itemsize >= 4:
        return 8
    if itemsize == 2:
        return 16
    return 32


def _round_up(x: int, m: int) -> int:
    return ((x + m - 1) // m) * m


def _vmem_budget_and_limit():
    """Generation-aware (budget, vmem_limit) in bytes."""
    cap = None
    try:
        info = pltpu.get_tpu_info()
        cap = getattr(info, "vmem_capacity_bytes", None)
    except Exception:
        cap = None
    if cap is None:
        cap = 64 * 1024 * 1024  # conservative fallback (v7x-sized VMEM)
    if cap >= 128 * 1024 * 1024:
        # v5e / v6e: 128 MiB physical -> bigger DMA bursts, fewer grid steps.
        return 64 * 1024 * 1024, 96 * 1024 * 1024
    # v7x: 64 MiB physical -> leave headroom.
    return 32 * 1024 * 1024, 48 * 1024 * 1024


def _pick_tile_rows(rows: int, H: int, dtype, budget_bytes: int) -> int:
    itemsize = jnp.dtype(dtype).itemsize
    mult = _sublane_multiple(dtype)
    # Per-row VMEM cost: 2x double-buffered input + 2x double-buffered output
    # pipeline buffers (4 * itemsize) plus ~2 f32 temporaries for the one-pass
    # upcast working set.
    per_row_bytes = H * (4 * itemsize + 2 * 4)
    tile_budget = budget_bytes // max(per_row_bytes, 1)
    # Cap by input-block bytes (~4 MiB) rather than a hard row count.
    tile_block = _MAX_INPUT_BLOCK_BYTES // max(H * itemsize, 1)
    tile = min(tile_budget, tile_block)
    tile = max(mult, (tile // mult) * mult)
    # Keep >= _MIN_GRID_STEPS grid steps when there is enough work so each
    # TensorCore (v7x megacore split) still gets multiple pipelined steps.
    if rows > tile:
        per_step = _round_up(pl.cdiv(rows, _MIN_GRID_STEPS), mult)
        tile = min(tile, max(mult, per_step))
    # Never tile larger than the (sublane-rounded) problem.
    tile = min(tile, _round_up(rows, mult))
    return tile


# ---------------------------------------------------------------------------
# Wrapper
# ---------------------------------------------------------------------------

def layer_norm_pallas(x, weight=None, bias=None, *, tile_rows=None):
    """F.layer_norm(x, (H,), weight, bias) with H = x.shape[-1]."""
    orig_shape = x.shape
    H = orig_shape[-1]
    rows = int(math.prod(orig_shape[:-1])) if len(orig_shape) > 1 else 1

    x2 = x.reshape(rows, H)

    mult = _sublane_multiple(x.dtype)
    budget_bytes, limit_bytes = _vmem_budget_and_limit()
    if tile_rows is None:
        tile_rows = _pick_tile_rows(rows, H, x.dtype, budget_bytes)
    else:
        tile_rows = max(mult, _round_up(int(tile_rows), mult))

    grid = (pl.cdiv(rows, tile_rows),)  # ragged tail handled by Pallas masking

    itemsize = jnp.dtype(x.dtype).itemsize
    has_affine = (weight is not None) or (bias is not None)
    param_bytes = 2 * H * itemsize if has_affine else 0
    cost = pl.CostEstimate(
        flops=8 * rows * H,
        transcendentals=rows,  # one rsqrt per row
        bytes_accessed=2 * rows * H * itemsize + param_bytes,
    )
    compiler_params = pltpu.CompilerParams(
        dimension_semantics=("parallel",),
        vmem_limit_bytes=limit_bytes,
    )
    x_spec = pl.BlockSpec((tile_rows, H), lambda i: (i, 0))
    out_spec = pl.BlockSpec((tile_rows, H), lambda i: (i, 0))
    out_shape = jax.ShapeDtypeStruct((rows, H), x.dtype)

    if has_affine:
        if weight is None:
            weight = jnp.ones((H,), dtype=x.dtype)
        if bias is None:
            bias = jnp.zeros((H,), dtype=x.dtype)
        # Fuse weight/bias into one small resident (2, H) parameter block.
        wb = jnp.stack([weight.reshape(H), bias.reshape(H)], axis=0)

        out = pl.pallas_call(
            _layernorm_affine_kernel,
            out_shape=out_shape,
            grid_spec=pltpu.PrefetchScalarGridSpec(
                num_scalar_prefetch=0,
                grid=grid,
                in_specs=[
                    x_spec,
                    pl.BlockSpec((2, H), lambda i: (0, 0)),
                ],
                out_specs=out_spec,
            ),
            compiler_params=compiler_params,
            cost_estimate=cost,
        )(x2, wb)
    else:
        out = pl.pallas_call(
            _layernorm_plain_kernel,
            out_shape=out_shape,
            grid_spec=pltpu.PrefetchScalarGridSpec(
                num_scalar_prefetch=0,
                grid=grid,
                in_specs=[x_spec],
                out_specs=out_spec,
            ),
            compiler_params=compiler_params,
            cost_estimate=cost,
        )(x2)

    return out.reshape(orig_shape)


# ---------------------------------------------------------------------------
# Reference + self-test
# ---------------------------------------------------------------------------

def _layer_norm_ref(x, weight=None, bias=None):
    mean = jnp.mean(x, axis=-1, keepdims=True)
    var = jnp.mean((x - mean) ** 2, axis=-1, keepdims=True)
    y = (x - mean) * jax.lax.rsqrt(var + EPS)
    if weight is not None:
        y = y * weight
    if bias is not None:
        y = y + bias
    return y


if __name__ == "__main__":
    key = jax.random.PRNGKey(0)
    B, S, H = 2, 8, 32
    kx, kw, kb, kx2 = jax.random.split(key, 4)
    x = jax.random.normal(kx, (B, S, H), dtype=jnp.float32)
    weight = jax.random.normal(kw, (H,), dtype=jnp.float32) * 0.1 + 1.0
    bias = jax.random.normal(kb, (H,), dtype=jnp.float32) * 0.1

    # Affine path.
    y = layer_norm_pallas(x, weight, bias)
    jax.block_until_ready(y)
    y_ref = _layer_norm_ref(x, weight, bias)
    assert jnp.allclose(y, y_ref, atol=1e-5, rtol=1e-5), "affine mismatch vs reference"

    # No-affine path (weight=None, bias=None), as in the module's default call.
    y_na = layer_norm_pallas(x)
    jax.block_until_ready(y_na)
    y_na_ref = _layer_norm_ref(x)
    assert jnp.allclose(y_na, y_na_ref, atol=1e-5, rtol=1e-5), "no-affine mismatch vs reference"

    # Ragged row count (3*5 = 15 rows) exercises the masked tail block path.
    x_ragged = jax.random.normal(kx2, (3, 5, H), dtype=jnp.float32)
    y2 = layer_norm_pallas(x_ragged, weight, bias)
    jax.block_until_ready(y2)
    y2_ref = _layer_norm_ref(x_ragged, weight, bias)
    assert jnp.allclose(y2, y2_ref, atol=1e-5, rtol=1e-5), "ragged mismatch vs reference"

    print("KERNEL_OK")
</pallas_src>

<mosaic_0001>
module attributes {stable_mosaic.version = 11 : i64} {
  func.func @_layernorm_affine_kernel(%arg0: i32, %arg1: memref<16x32xf32, #tpu.memory_space<vmem>>, %arg2: memref<2x32xf32, #tpu.memory_space<vmem>>, %arg3: memref<16x32xf32, #tpu.memory_space<vmem>>) attributes {dimension_semantics = [#tpu.dimension_semantics<parallel>], iteration_bounds = array<i64: 1>, scalar_prefetch = 0 : i64, scratch_operands = 0 : i64, tpu.core_type = #tpu.core_type<tc>, window_params = [{transform_indices = @transform_0, window_bounds = array<i64: 16, 32>}, {pipeline_mode = #tpu.pipeline_mode<synchronous>, transform_indices = @transform_1, window_bounds = array<i64: 2, 32>}, {transform_indices = @transform_2, window_bounds = array<i64: 16, 32>}]} {
    %c0 = arith.constant 0 : index
    %c0_0 = arith.constant 0 : index
    %0 = vector.load %arg2[%c0, %c0_0] : memref<2x32xf32, #tpu.memory_space<vmem>>, vector<1x32xf32>
    %c1 = arith.constant 1 : index
    %c0_1 = arith.constant 0 : index
    %1 = vector.load %arg2[%c1, %c0_1] : memref<2x32xf32, #tpu.memory_space<vmem>>, vector<1x32xf32>
    %c0_2 = arith.constant 0 : index
    %c0_3 = arith.constant 0 : index
    %2 = vector.load %arg1[%c0_2, %c0_3] : memref<16x32xf32, #tpu.memory_space<vmem>>, vector<16x32xf32>
    %cst = arith.constant dense<0.000000e+00> : vector<16xf32>
    %3 = vector.multi_reduction <add>, %2, %cst [1] : vector<16x32xf32> to vector<16xf32>
    %4 = vector.shape_cast %3 : vector<16xf32> to vector<16x1xf32>
    %5 = arith.mulf %2, %2 : vector<16x32xf32>
    %cst_4 = arith.constant dense<0.000000e+00> : vector<16xf32>
    %6 = vector.multi_reduction <add>, %5, %cst_4 [1] : vector<16x32xf32> to vector<16xf32>
    %7 = vector.shape_cast %6 : vector<16xf32> to vector<16x1xf32>
    %cst_5 = arith.constant 3.125000e-02 : f32
    %8 = vector.broadcast %cst_5 : f32 to vector<16x1xf32>
    %9 = arith.mulf %4, %8 : vector<16x1xf32>
    %cst_6 = arith.constant 3.125000e-02 : f32
    %10 = vector.broadcast %cst_6 : f32 to vector<16x1xf32>
    %11 = arith.mulf %7, %10 : vector<16x1xf32>
    %12 = arith.mulf %9, %9 : vector<16x1xf32>
    %13 = arith.subf %11, %12 : vector<16x1xf32>
    %cst_7 = arith.constant 0.000000e+00 : f32
    %14 = vector.broadcast %cst_7 : f32 to vector<16x1xf32>
    %15 = arith.maximumf %13, %14 : vector<16x1xf32>
    %cst_8 = arith.constant 9.99999974E-6 : f32
    %16 = vector.broadcast %cst_8 : f32 to vector<16x1xf32>
    %17 = arith.addf %15, %16 : vector<16x1xf32>
    %18 = math.rsqrt %17 : vector<16x1xf32>
    %19 = vector.broadcast %9 : vector<16x1xf32> to vector<16x32xf32>
    %20 = arith.subf %2, %19 : vector<16x32xf32>
    %21 = vector.broadcast %18 : vector<16x1xf32> to vector<16x32xf32>
    %22 = arith.mulf %20, %21 : vector<16x32xf32>
    %23 = vector.broadcast %0 : vector<1x32xf32> to vector<16x32xf32>
    %24 = arith.mulf %22, %23 : vector<16x32xf32>
    %25 = vector.broadcast %1 : vector<1x32xf32> to vector<16x32xf32>
    %26 = arith.addf %24, %25 : vector<16x32xf32>
    %c0_9 = arith.constant 0 : index
    %c0_10 = arith.constant 0 : index
    %27 = vector.load %arg3[%c0_9, %c0_10] : memref<16x32xf32, #tpu.memory_space<vmem>>, vector<16x32xf32>
    tpu.vector_store %arg3[%c0_9, %c0_10], %26 {strides = array<i32>} : memref<16x32xf32, #tpu.memory_space<vmem>>, vector<16x32xf32>,
    return
  }
  func.func @transform_0(%arg0: i32) -> (i32, i32) {
    %c0_i32 = arith.constant 0 : i32
    %c0_i32_0 = arith.constant 0 : i32
    return %arg0, %c0_i32 : i32, i32
  }
  func.func @transform_1(%arg0: i32) -> (i32, i32) {
    %c0_i32 = arith.constant 0 : i32
    %c0_i32_0 = arith.constant 0 : i32
    %c0_i32_1 = arith.constant 0 : i32
    return %c0_i32, %c0_i32_0 : i32, i32
  }
  func.func @transform_2(%arg0: i32) -> (i32, i32) {
    %c0_i32 = arith.constant 0 : i32
    %c0_i32_0 = arith.constant 0 : i32
    return %arg0, %c0_i32 : i32, i32
  }
}

</mosaic_0001>

<llo_original>
// kernel: tpu_custom_call.1
$region0: #{tpu_custom_call.1}
  #allocation0 [shape = 'u32[]', space=smem, size = 0x4, offset = 0x4, fixed_abs, tag = 'smem constant byte address 0x4 - core index']
  #allocation1 [shape = 'u32[144,128]{1,0:T(1,128)}', space=vmem, size = 0x12000, scoped, tag = 'internal scratch']
  %s0 = inlined_call_operand.hbm [shape: f32[16,32], index: 0, kind: input, shape index: {}]
  %s1 = inlined_call_operand.vmem [shape: f32[2,32], index: 1, kind: input, shape index: {}]
  %s2 = inlined_call_operand.hbm [shape: f32[16,32], index: 2, kind: output, shape index: {}]
  %s3 = sld [smem:[#allocation0]]
  $region22: #{tpu_custom_call.1} parent=0
    _
  %s5 = ssub.s32 1, %s3
  %s6 = scalar_select 0, %s5, %s3
  $region1: #{tpu_custom_call.1} parent=0
    #allocation2 [shape = 'u8[8192]{0}', space=vmem, size = 0x2000, scoped, tag = 'input window, operand 0, single buffered']
    #allocation3 [shape = 's32[1]{0}', space=sflag, size = 0x4, scoped, tag = 'scoped memory for tpu_custom_call.1']
    #allocation4 [shape = 's32[1]{0}', space=sflag, size = 0x4, scoped, tag = 'scoped memory for tpu_custom_call.1']
    #allocation5 [shape = 'u8[8192]{0}', space=vmem, size = 0x2000, scoped, tag = 'output window, operand 0, single buffered']
    %7 = vsyncpa [#allocation3], 0
    %8 = vsyncpa [#allocation4], 0
    // Predicated region
    $region2: #{tpu_custom_call.1} parent=1 // pred_check
      _
    $region3: #{tpu_custom_call.1} parent=1 // pred_check_branch
      %10 = sbr.rel (0) target = $region5
    $region4: #{tpu_custom_call.1} parent=1 // pred_region
      %s12 = ssub.s32 256, 256
      %13 = vsyncadd [#allocation3], %s12
      %s14 = sshll.u32 [#allocation2], 4
      %s15 = int_to_ptr.vmem [resolvable:$true] %s14
      %20 = dma.hbm_to_vmem [thread:$0]  %s0, 256, %s15, [#allocation3], 128, 128, 8
    $region5: #{tpu_custom_call.1} parent=1 // pred_fallthru
      _
    // Predicated region
    $region6: #{tpu_custom_call.1} parent=1 // pred_check
      _
    $region7: #{tpu_custom_call.1} parent=1 // pred_check_branch
      %22 = sbr.rel (0) target = $region9
    $region8: #{tpu_custom_call.1} parent=1 // pred_region
      _
    $region9: #{tpu_custom_call.1} parent=1 // pred_fallthru
      _
    // Predicated region
    $region10: #{tpu_custom_call.1} parent=1 // pred_check
      _
    $region11: #{tpu_custom_call.1} parent=1 // pred_check_branch
      %24 = sbr.rel (0) target = $region13
    $region12: #{tpu_custom_call.1} parent=1 // pred_region
      %25 = dma.done [#allocation3], 256
    $region13: #{tpu_custom_call.1} parent=1 // pred_fallthru
      _
    %v26 = vld [vmem:[%s1] sm:$0x1]
    %v27 = vld [vmem:[%s1 + $0x1] sm:$0x1]
    %v28 = vld [vmem:[#allocation2] sm:$0xff]
    %v29 = vld [vmem:[#allocation2 + $0x8] sm:$0xff]
    %vm30 = vcmask 261120
    %v31 = vsel %vm30, %v28, 0.0
    %32 = vadd.xlane.f32.xlu0 %v31
    %v33 = vpop.xlane.xlu0 %32
    %v34 = vsel %vm30, %v29, 0.0
    %35 = vadd.xlane.f32.xlu0 %v34
    %v36 = vpop.xlane.xlu0 %35
    %v37 = vmul.f32 %v28, %v28
    %v38 = vmul.f32 %v29, %v29
    %v39 = vsel %vm30, %v37, 0.0
    %40 = vadd.xlane.f32.xlu0 %v39
    %v41 = vpop.xlane.xlu0 %40
    %v42 = vsel %vm30, %v38, 0.0
    %43 = vadd.xlane.f32.xlu0 %v42
    %v44 = vpop.xlane.xlu0 %43
    %v45 = vmul.f32 %v33, 0.03125
    %v46 = vmul.f32 %v36, 0.03125
    %v47 = vmul.f32 %v41, 0.03125
    %v48 = vmul.f32 %v44, 0.03125
    %v49 = vmul.f32 %v45, %v45
    %v50 = vmul.f32 %v46, %v46
    %v51 = vsub.f32 %v47, %v49
    %v52 = vsub.f32 %v48, %v50
    %v53 = vmax.f32 %v51, 0.0
    %v54 = vmax.f32 %v52, 0.0
    %v55 = vadd.f32 %v53, 1e-05
    %v56 = vadd.f32 %v54, 1e-05
    %v57 = vrsqrt.pop %v55
    %v58 = vrsqrt.pop %v56
    %v59 = vsub.f32 %v28, %v45
    %v60 = vsub.f32 %v29, %v46
    %v61 = vmul.f32 %v59, %v57
    %v62 = vmul.f32 %v60, %v58
    %v63 = vlaneseq
    %v64 = vshrl.u32 %v63, 7
    %v65 = vsub.s32 0, %v64
    %v66 = vrot.slane %v26, %v65
    %v67 = vmul.f32 %v61, %v66
    %v68 = vmul.f32 %v62, %v66
    %v69 = vlaneseq
    %v70 = vshrl.u32 %v69, 7
    %v71 = vsub.s32 0, %v70
    %v72 = vrot.slane %v27, %v71
    %v73 = vadd.f32 %v67, %v72
    %v74 = vadd.f32 %v68, %v72
    %75 = vst.msk [vmem:[#allocation5] sm:$0xff] %vm30, %v73
    %76 = vst.msk [vmem:[#allocation5 + $0x8] sm:$0xff] %vm30, %v74
    // Predicated region
    $region14: #{tpu_custom_call.1} parent=1 // pred_check
      _
    $region15: #{tpu_custom_call.1} parent=1 // pred_check_branch
      %78 = sbr.rel (0) target = $region17
    $region16: #{tpu_custom_call.1} parent=1 // pred_region
      %s80 = ssub.s32 256, 256
      %81 = vsyncadd [#allocation4], %s80
      %s82 = sshll.u32 [#allocation5], 4
      %s83 = int_to_ptr.vmem [resolvable:$true] %s82
      %88 = dma.vmem_to_hbm [thread:$0]  %s83, 256, %s2, [#allocation4], 128, 128, 8
    $region17: #{tpu_custom_call.1} parent=1 // pred_fallthru
      _
    // Predicated region
    $region18: #{tpu_custom_call.1} parent=1 // pred_check
      _
    $region19: #{tpu_custom_call.1} parent=1 // pred_check_branch
      %90 = sbr.rel (0) target = $region21
    $region20: #{tpu_custom_call.1} parent=1 // pred_region
      %91 = dma.done [#allocation4], 256
    $region21: #{tpu_custom_call.1} parent=1 // pred_fallthru
      _
    %92 = vsyncpa [#allocation3], 1
    %93 = vsyncpa [#allocation4], 1

</llo_original>
